<compile_context>
chip_gen: v7x
topology: tpu7x:2x2x1
jax: 0.10.0
libtpu: 0.0.40
codegen_flags: <defaults>
</compile_context>

<pallas_src>
import jax
import jax.numpy as jnp
import numpy as np
from jax.experimental import pallas as pl
from jax.experimental.pallas import tpu as pltpu


# ----------------------------- kernels ------------------------------------- #

def _simple_attention_kernel(x_ref, pool_ref, w1_ref, b1_ref, w2_ref, b2_ref,
                             res_ref, attn_ref):
    # x_ref: (B*N, M) fused bags*instances; pool_ref: (B, B*N) 0/1 membership;
    # w1: (M, E); b1: (1, E); w2: (1, E) (= w_last^T); b2: (1, 1) scalar in SMEM.
    x = x_ref[...]                                                    # keep native dtype for MXU
    # Fused embedding projection for ALL bags at once (single MXU matmul).
    h = jnp.tanh(jnp.dot(x, w1_ref[...], preferred_element_type=jnp.float32)
                 + b1_ref[...].astype(jnp.float32))                   # (B*N, E) f32
    # E -> 1 projection on the VPU (mul) + lane reduce, not a width-1 MXU pass.
    s = (jnp.sum(h * w2_ref[...].astype(jnp.float32), axis=-1, keepdims=True)
         + b2_ref[0, 0])                                              # (B*N, 1)
    # Reference softmax is over a size-1 trailing axis -> identically 1.0 for
    # finite scores; exp(s - s) reproduces it exactly (and keeps NaN semantics).
    attn_ref[...] = jnp.exp(s - s).astype(attn_ref.dtype)             # (B*N, 1)
    # result = einsum('ki,kij->kj', attn, x) with attn == 1  ==  pool @ x.
    # Runs on the MXU and is independent of the score matmuls above.
    res_ref[...] = jnp.dot(pool_ref[...], x,
                           preferred_element_type=jnp.float32).astype(res_ref.dtype)


def _gated_attention_kernel(x_ref, pool_ref, wl_ref, bl_ref, wr_ref, br_ref,
                            w2_ref, b2_ref, res_ref, attn_ref):
    x = x_ref[...]
    left = jnp.tanh(jnp.dot(x, wl_ref[...], preferred_element_type=jnp.float32)
                    + bl_ref[...].astype(jnp.float32))                # (B*N, E) f32
    right = jax.nn.sigmoid(jnp.dot(x, wr_ref[...], preferred_element_type=jnp.float32)
                           + br_ref[...].astype(jnp.float32))         # (B*N, E) f32
    g = left * right
    s = (jnp.sum(g * w2_ref[...].astype(jnp.float32), axis=-1, keepdims=True)
         + b2_ref[0, 0])                                              # (B*N, 1)
    attn_ref[...] = jnp.exp(s - s).astype(attn_ref.dtype)             # (B*N, 1)
    res_ref[...] = jnp.dot(pool_ref[...], x,
                           preferred_element_type=jnp.float32).astype(res_ref.dtype)


# ----------------------------- wrapper -------------------------------------- #

def attention_module_forward(x, params, att_block="simple"):
    """Pallas forward of AttentionModule. Returns (result [B, M], attention_map [B, N])."""
    B, N, M = x.shape
    E = params["w_last"].shape[0]
    BN = B * N

    # Fuse bags: one (B*N, M) slab -> one MXU matmul for the whole batch.
    x2 = x.reshape(BN, M)
    # 0/1 bag-membership matrix: row b is 1 on columns [b*N, (b+1)*N).
    pool = jnp.repeat(jnp.eye(B, dtype=x.dtype), N, axis=1)           # (B, B*N)
    # Final projection weight as a (1, E) row (VPU path); scalar bias to SMEM (f32).
    w_last_row = params["w_last"].reshape(1, E)
    b_last = params["b_last"].reshape(1, 1).astype(jnp.float32)

    full = lambda shape: pl.BlockSpec(shape, lambda i: (0,) * len(shape))
    smem = pl.BlockSpec(memory_space=pltpu.MemorySpace.SMEM)

    if att_block == "simple":
        kernel = _simple_attention_kernel
        inputs = (x2, pool, params["w"], params["b"], w_last_row, b_last)
        in_specs = [full((BN, M)), full((B, BN)),
                    full((M, E)), full((1, E)), full((1, E)), smem]
    elif att_block == "gated":
        kernel = _gated_attention_kernel
        inputs = (x2, pool, params["w_left"], params["b_left"],
                  params["w_right"], params["b_right"], w_last_row, b_last)
        in_specs = [full((BN, M)), full((B, BN)),
                    full((M, E)), full((1, E)), full((M, E)), full((1, E)),
                    full((1, E)), smem]
    else:
        raise ValueError(att_block)

    res, attn_col = pl.pallas_call(
        kernel,
        grid=(1,),   # all bags fused in one step; tile bags here if B*N*M outgrows VMEM
        in_specs=in_specs,
        out_specs=[
            pl.BlockSpec((B, M), lambda i: (0, 0)),    # lane-dense result, no size-1 axes
            pl.BlockSpec((BN, 1), lambda i: (0, 0)),
        ],
        out_shape=[
            jax.ShapeDtypeStruct((B, M), x.dtype),
            jax.ShapeDtypeStruct((BN, 1), x.dtype),
        ],
        compiler_params=pltpu.CompilerParams(dimension_semantics=("parallel",)),
    )(*inputs)

    # matches attention_map.reshape(shape[0], shape[1]) in the torch module
    return res, attn_col.reshape(B, N)


# ----------------------------- reference (pure JAX) ------------------------- #

def _ref_forward(x, params, att_block="simple"):
    if att_block == "simple":
        h = jnp.tanh(x @ params["w"] + params["b"][0])
        s = h @ params["w_last"] + params["b_last"][0]
    else:
        left = jnp.tanh(x @ params["w_left"] + params["b_left"][0])
        right = jax.nn.sigmoid(x @ params["w_right"] + params["b_right"][0])
        s = (right * left) @ params["w_last"] + params["b_last"][0]
    attn = jax.nn.softmax(s, axis=-1)                 # size-1 axis -> exactly 1.0
    attn2 = attn.reshape(x.shape[0], x.shape[1])
    res = jnp.einsum("ki,kij->kj", attn2, x)
    return res, attn2


# ----------------------------- deterministic params ------------------------- #

def _init_linear(key, fan_in, fan_out):
    # torch nn.Linear-style uniform(-1/sqrt(fan_in), 1/sqrt(fan_in)), deterministic.
    kw, kb = jax.random.split(key)
    bound = 1.0 / np.sqrt(fan_in)
    w = jax.random.uniform(kw, (fan_in, fan_out), jnp.float32, -bound, bound)
    b = jax.random.uniform(kb, (1, fan_out), jnp.float32, -bound, bound)
    return w, b


def make_params(key, input_dim, embed_dim, att_block="simple"):
    if att_block == "simple":
        k1, k2 = jax.random.split(key, 2)
        w, b = _init_linear(k1, input_dim, embed_dim)
        wl, bl = _init_linear(k2, embed_dim, 1)
        return {"w": w, "b": b, "w_last": wl, "b_last": bl}
    else:
        k1, k2, k3 = jax.random.split(key, 3)
        wle, ble = _init_linear(k1, input_dim, embed_dim)
        wri, bri = _init_linear(k2, input_dim, embed_dim)
        wl, bl = _init_linear(k3, embed_dim, 1)
        return {"w_left": wle, "b_left": ble, "w_right": wri, "b_right": bri,
                "w_last": wl, "b_last": bl}


# ----------------------------- main ------------------------------------------ #

if __name__ == "__main__":
    B, N, M, E = 2, 8, 16, 32   # bags, instances per bag, input_dim, embed_dim
    key = jax.random.PRNGKey(0)
    kx, kp_s, kp_g = jax.random.split(key, 3)
    x = jax.random.normal(kx, (B, N, M), jnp.float32)

    ok = True
    for att_block, kp in (("simple", kp_s), ("gated", kp_g)):
        params = make_params(kp, M, E, att_block)
        res, attn = attention_module_forward(x, params, att_block)
        jax.block_until_ready((res, attn))
        res_ref, attn_ref = _ref_forward(x, params, att_block)
        ok &= bool(jnp.allclose(res, res_ref, atol=1e-4, rtol=1e-4))
        ok &= bool(jnp.allclose(attn, attn_ref, atol=1e-5, rtol=1e-5))
        assert res.shape == (B, M) and attn.shape == (B, N)

    # bf16 smoke run: operands stay bf16 on the MXU (no upcast), f32 accumulation.
    params_b = jax.tree_util.tree_map(lambda a: a.astype(jnp.bfloat16),
                                      make_params(kp_s, M, E, "simple"))
    xb = x.astype(jnp.bfloat16)
    res_b, attn_b = attention_module_forward(xb, params_b, "simple")
    jax.block_until_ready((res_b, attn_b))
    res_b_ref = jnp.sum(xb.astype(jnp.float32), axis=1)
    ok &= bool(jnp.allclose(res_b.astype(jnp.float32), res_b_ref, atol=5e-2, rtol=5e-2))
    ok &= bool(jnp.all(attn_b.astype(jnp.float32) == 1.0))

    print("KERNEL_OK" if ok else "MISMATCH")
</pallas_src>

<mosaic_0001>
module attributes {stable_mosaic.version = 11 : i64} {
  func.func @_simple_attention_kernel(%arg0: i32, %arg1: memref<16x16xf32, #tpu.memory_space<vmem>>, %arg2: memref<2x16xf32, #tpu.memory_space<vmem>>, %arg3: memref<16x32xf32, #tpu.memory_space<vmem>>, %arg4: memref<1x32xf32, #tpu.memory_space<vmem>>, %arg5: memref<1x32xf32, #tpu.memory_space<vmem>>, %arg6: memref<1x1xf32, #tpu.memory_space<smem>>, %arg7: memref<2x16xf32, #tpu.memory_space<vmem>>, %arg8: memref<16x1xf32, #tpu.memory_space<vmem>>) attributes {dimension_semantics = [#tpu.dimension_semantics<parallel>], iteration_bounds = array<i64: 1>, scalar_prefetch = 0 : i64, scratch_operands = 0 : i64, tpu.core_type = #tpu.core_type<tc>, window_params = [{pipeline_mode = #tpu.pipeline_mode<synchronous>, transform_indices = @transform_0, window_bounds = array<i64: 16, 16>}, {pipeline_mode = #tpu.pipeline_mode<synchronous>, transform_indices = @transform_1, window_bounds = array<i64: 2, 16>}, {pipeline_mode = #tpu.pipeline_mode<synchronous>, transform_indices = @transform_2, window_bounds = array<i64: 16, 32>}, {pipeline_mode = #tpu.pipeline_mode<synchronous>, transform_indices = @transform_3, window_bounds = array<i64: 1, 32>}, {pipeline_mode = #tpu.pipeline_mode<synchronous>, transform_indices = @transform_4, window_bounds = array<i64: 1, 32>}, {transform_indices = @transform_5, window_bounds = array<i64: 1, 1>}, {pipeline_mode = #tpu.pipeline_mode<synchronous>, transform_indices = @transform_6, window_bounds = array<i64: 2, 16>}, {pipeline_mode = #tpu.pipeline_mode<synchronous>, transform_indices = @transform_7, window_bounds = array<i64: 16, 1>}]} {
    %c0 = arith.constant 0 : index
    %c0_0 = arith.constant 0 : index
    %0 = vector.load %arg1[%c0, %c0_0] : memref<16x16xf32, #tpu.memory_space<vmem>>, vector<16x16xf32>
    %c0_1 = arith.constant 0 : index
    %c0_2 = arith.constant 0 : index
    %1 = vector.load %arg3[%c0_1, %c0_2] : memref<16x32xf32, #tpu.memory_space<vmem>>, vector<16x32xf32>
    %cst = arith.constant dense<0.000000e+00> : vector<16x32xf32>
    %2 = tpu.matmul %0, %1, %cst {dimension_numbers = #tpu.dot_dimension_numbers<[1], [0], [0], [1], [0, 0, 1, 1], [], []>} : vector<16x16xf32>, vector<16x32xf32>, vector<16x32xf32> -> vector<16x32xf32>
    %c0_3 = arith.constant 0 : index
    %c0_4 = arith.constant 0 : index
    %3 = vector.load %arg4[%c0_3, %c0_4] : memref<1x32xf32, #tpu.memory_space<vmem>>, vector<1x32xf32>
    %4 = vector.broadcast %3 : vector<1x32xf32> to vector<16x32xf32>
    %5 = arith.addf %2, %4 : vector<16x32xf32>
    %6 = math.tanh %5 : vector<16x32xf32>
    %c0_5 = arith.constant 0 : index
    %c0_6 = arith.constant 0 : index
    %7 = vector.load %arg5[%c0_5, %c0_6] : memref<1x32xf32, #tpu.memory_space<vmem>>, vector<1x32xf32>
    %8 = vector.broadcast %7 : vector<1x32xf32> to vector<16x32xf32>
    %9 = arith.mulf %6, %8 : vector<16x32xf32>
    %cst_7 = arith.constant dense<0.000000e+00> : vector<16xf32>
    %10 = vector.multi_reduction <add>, %9, %cst_7 [1] : vector<16x32xf32> to vector<16xf32>
    %11 = vector.shape_cast %10 : vector<16xf32> to vector<16x1xf32>
    %c0_8 = arith.constant 0 : index
    %c0_9 = arith.constant 0 : index
    %12 = memref.load %arg6[%c0_8, %c0_9] : memref<1x1xf32, #tpu.memory_space<smem>>
    %13 = vector.broadcast %12 : f32 to vector<16x1xf32>
    %14 = arith.addf %11, %13 : vector<16x1xf32>
    %15 = arith.subf %14, %14 : vector<16x1xf32>
    %16 = math.exp %15 : vector<16x1xf32>
    %c0_10 = arith.constant 0 : index
    %c0_11 = arith.constant 0 : index
    %17 = vector.load %arg8[%c0_10, %c0_11] : memref<16x1xf32, #tpu.memory_space<vmem>>, vector<16x1xf32>
    tpu.vector_store %arg8[%c0_10, %c0_11], %16 {strides = array<i32>} : memref<16x1xf32, #tpu.memory_space<vmem>>, vector<16x1xf32>,
    %c0_12 = arith.constant 0 : index
    %c0_13 = arith.constant 0 : index
    %18 = vector.load %arg2[%c0_12, %c0_13] : memref<2x16xf32, #tpu.memory_space<vmem>>, vector<2x16xf32>
    %cst_14 = arith.constant dense<0.000000e+00> : vector<2x16xf32>
    %19 = tpu.matmul %18, %0, %cst_14 {dimension_numbers = #tpu.dot_dimension_numbers<[1], [0], [0], [1], [0, 0, 1, 1], [], []>} : vector<2x16xf32>, vector<16x16xf32>, vector<2x16xf32> -> vector<2x16xf32>
    %c0_15 = arith.constant 0 : index
    %c0_16 = arith.constant 0 : index
    %20 = vector.load %arg7[%c0_15, %c0_16] : memref<2x16xf32, #tpu.memory_space<vmem>>, vector<2x16xf32>
    tpu.vector_store %arg7[%c0_15, %c0_16], %19 {strides = array<i32>} : memref<2x16xf32, #tpu.memory_space<vmem>>, vector<2x16xf32>,
    return
  }
  func.func @transform_0(%arg0: i32) -> (i32, i32) {
    %c0_i32 = arith.constant 0 : i32
    %c0_i32_0 = arith.constant 0 : i32
    %c0_i32_1 = arith.constant 0 : i32
    return %c0_i32, %c0_i32_0 : i32, i32
  }
  func.func @transform_1(%arg0: i32) -> (i32, i32) {
    %c0_i32 = arith.constant 0 : i32
    %c0_i32_0 = arith.constant 0 : i32
    %c0_i32_1 = arith.constant 0 : i32
    return %c0_i32, %c0_i32_0 : i32, i32
  }
  func.func @transform_2(%arg0: i32) -> (i32, i32) {
    %c0_i32 = arith.constant 0 : i32
    %c0_i32_0 = arith.constant 0 : i32
    %c0_i32_1 = arith.constant 0 : i32
    return %c0_i32, %c0_i32_0 : i32, i32
  }
  func.func @transform_3(%arg0: i32) -> (i32, i32) {
    %c0_i32 = arith.constant 0 : i32
    %c0_i32_0 = arith.constant 0 : i32
    %c0_i32_1 = arith.constant 0 : i32
    return %c0_i32, %c0_i32_0 : i32, i32
  }
  func.func @transform_4(%arg0: i32) -> (i32, i32) {
    %c0_i32 = arith.constant 0 : i32
    %c0_i32_0 = arith.constant 0 : i32
    %c0_i32_1 = arith.constant 0 : i32
    return %c0_i32, %c0_i32_0 : i32, i32
  }
  func.func @transform_5(%arg0: i32) -> (i32, i32) {
    %c0_i32 = arith.constant 0 : i32
    %c0_i32_0 = arith.constant 0 : i32
    %c0_i32_1 = arith.constant 0 : i32
    return %c0_i32, %c0_i32_0 : i32, i32
  }
  func.func @transform_6(%arg0: i32) -> (i32, i32) {
    %c0_i32 = arith.constant 0 : i32
    %c0_i32_0 = arith.constant 0 : i32
    %c0_i32_1 = arith.constant 0 : i32
    return %c0_i32, %c0_i32_0 : i32, i32
  }
  func.func @transform_7(%arg0: i32) -> (i32, i32) {
    %c0_i32 = arith.constant 0 : i32
    %c0_i32_0 = arith.constant 0 : i32
    %c0_i32_1 = arith.constant 0 : i32
    return %c0_i32, %c0_i32_0 : i32, i32
  }
}

</mosaic_0001>

<llo_original>
// kernel: tpu_custom_call.1
$region0: #{tpu_custom_call.1}
  #allocation0 [shape = 'u32[]', space=smem, size = 0x4, offset = 0x4, fixed_abs, tag = 'smem constant byte address 0x4 - core index']
  #allocation1 [shape = 'u32[144,128]{1,0:T(1,128)}', space=vmem, size = 0x12000, scoped, tag = 'internal scratch']
  #allocation2 [shape = 'f32[1,1]{1,0:T(1,128)S(6)}', space=smem, size = 0x200, scoped, tag = 'scoped memory for tpu_custom_call.1']
  %s0 = inlined_call_operand.hbm [shape: f32[16,16], index: 0, kind: input, shape index: {}]
  %s1 = inlined_call_operand.vmem [shape: f32[2,16], index: 1, kind: input, shape index: {}]
  %s2 = inlined_call_operand.hbm [shape: f32[16,32], index: 2, kind: input, shape index: {}]
  %s3 = inlined_call_operand.vmem [shape: f32[1,32], index: 3, kind: input, shape index: {}]
  %s4 = inlined_call_operand.vmem [shape: f32[1,32], index: 4, kind: input, shape index: {}]
  %s5 = inlined_call_operand.<no memory space> [shape: f32[1,1], index: 5, kind: input, shape index: {}]
  %s6 = inlined_call_operand.hbm [shape: f32[2,16], index: 6, kind: output, shape index: {0}]
  %s7 = inlined_call_operand.vmem [shape: f32[16,1], index: 7, kind: output, shape index: {1}]
  %8 = xla_tuple %s6, %s7
  %s9 = sld [smem:[#allocation0]]
  $region50: #{tpu_custom_call.1} parent=0
    _
  %s11 = ssub.s32 1, %s9
  %s12 = scalar_select 0, %s11, %s9
  %13 = sst [smem:[#allocation2]] %s5
  $region1: #{tpu_custom_call.1} parent=0
    #allocation3 [shape = 'u8[8192]{0}', space=vmem, size = 0x2000, scoped, tag = 'input window, operand 0, single buffered']
    #allocation4 [shape = 's32[1]{0}', space=sflag, size = 0x4, scoped, tag = 'scoped memory for tpu_custom_call.1']
    #allocation5 [shape = 's32[1]{0}', space=sflag, size = 0x4, scoped, tag = 'scoped memory for tpu_custom_call.1']
    #allocation6 [shape = 'u8[8192]{0}', space=vmem, size = 0x2000, scoped, tag = 'input window, operand 2, single buffered']
    #allocation7 [shape = 's32[1]{0}', space=sflag, size = 0x4, scoped, tag = 'scoped memory for tpu_custom_call.1']
    #allocation8 [shape = 'u8[1024]{0}', space=vmem, size = 0x400, scoped, tag = 'output window, operand 0, single buffered']
    %14 = vsyncpa [#allocation4], 0
    %15 = vsyncpa [#allocation7], 0
    %16 = vsyncpa [#allocation5], 0
    // Predicated region
    $region2: #{tpu_custom_call.1} parent=1 // pred_check
      _
    $region3: #{tpu_custom_call.1} parent=1 // pred_check_branch
      %18 = sbr.rel (0) target = $region5
    $region4: #{tpu_custom_call.1} parent=1 // pred_region
      %s20 = ssub.s32 256, 256
      %21 = vsyncadd [#allocation4], %s20
      %s22 = sshll.u32 [#allocation3], 4
      %s23 = int_to_ptr.vmem [resolvable:$true] %s22
      %28 = dma.hbm_to_vmem [thread:$0]  %s0, 256, %s23, [#allocation4], 128, 128, 8
    $region5: #{tpu_custom_call.1} parent=1 // pred_fallthru
      _
    // Predicated region
    $region6: #{tpu_custom_call.1} parent=1 // pred_check
      _
    $region7: #{tpu_custom_call.1} parent=1 // pred_check_branch
      %30 = sbr.rel (0) target = $region9
    $region8: #{tpu_custom_call.1} parent=1 // pred_region
      _
    $region9: #{tpu_custom_call.1} parent=1 // pred_fallthru
      _
    // Predicated region
    $region10: #{tpu_custom_call.1} parent=1 // pred_check
      _
    $region11: #{tpu_custom_call.1} parent=1 // pred_check_branch
      %32 = sbr.rel (0) target = $region13
    $region12: #{tpu_custom_call.1} parent=1 // pred_region
      %s34 = ssub.s32 256, 256
      %35 = vsyncadd [#allocation7], %s34
      %s36 = sshll.u32 [#allocation6], 4
      %s37 = int_to_ptr.vmem [resolvable:$true] %s36
      %42 = dma.hbm_to_vmem [thread:$0]  %s2, 256, %s37, [#allocation7], 128, 128, 8
    $region13: #{tpu_custom_call.1} parent=1 // pred_fallthru
      _
    // Predicated region
    $region14: #{tpu_custom_call.1} parent=1 // pred_check
      _
    $region15: #{tpu_custom_call.1} parent=1 // pred_check_branch
      %44 = sbr.rel (0) target = $region17
    $region16: #{tpu_custom_call.1} parent=1 // pred_region
      _
    $region17: #{tpu_custom_call.1} parent=1 // pred_fallthru
      _
    // Predicated region
    $region18: #{tpu_custom_call.1} parent=1 // pred_check
      _
    $region19: #{tpu_custom_call.1} parent=1 // pred_check_branch
      %46 = sbr.rel (0) target = $region21
    $region20: #{tpu_custom_call.1} parent=1 // pred_region
      _
    $region21: #{tpu_custom_call.1} parent=1 // pred_fallthru
      _
    // Predicated region
    $region22: #{tpu_custom_call.1} parent=1 // pred_check
      _
    $region23: #{tpu_custom_call.1} parent=1 // pred_check_branch
      %48 = sbr.rel (0) target = $region25
    $region24: #{tpu_custom_call.1} parent=1 // pred_region
      _
    $region25: #{tpu_custom_call.1} parent=1 // pred_fallthru
      _
    // Predicated region
    $region26: #{tpu_custom_call.1} parent=1 // pred_check
      _
    $region27: #{tpu_custom_call.1} parent=1 // pred_check_branch
      %50 = sbr.rel (0) target = $region29
    $region28: #{tpu_custom_call.1} parent=1 // pred_region
      %51 = dma.done [#allocation4], 256
    $region29: #{tpu_custom_call.1} parent=1 // pred_fallthru
      _
    // Predicated region
    $region30: #{tpu_custom_call.1} parent=1 // pred_check
      _
    $region31: #{tpu_custom_call.1} parent=1 // pred_check_branch
      %53 = sbr.rel (0) target = $region33
    $region32: #{tpu_custom_call.1} parent=1 // pred_region
      %54 = dma.done [#allocation7], 256
    $region33: #{tpu_custom_call.1} parent=1 // pred_fallthru
      _
    %v55 = vld [vmem:[#allocation3] sm:$0xff]
    %v56 = vld [vmem:[#allocation3 + $0x8] sm:$0xff]
    %v57 = vld [vmem:[#allocation6] sm:$0xff]
    %v58 = vld [vmem:[#allocation6 + $0x8] sm:$0xff]
    %v59 = vld [vmem:[%s3] sm:$0x1]
    %v61 = vlaneseq
    %v62 = vshrl.u32 %v61, 7
    %v63 = vsub.s32 0, %v62
    %v64 = vrot.slane %v59, %v63
    %vm66 = vcmask 130048
    %v68 = vsel %vm66, %v55, 0
    %v71 = vsel %vm66, %v56, 0
    %73 = vmatprep.subr.mxu0 0.0
    %74 = vmatpush1.msra.mxu0 %v57
    %75 = vmatprep.subr.mxu0 0.0
    %76 = vmatpush1.msra.mxu0 %v58
    %77 = vmatprep.subr.mxu0 0.0
    %78 = vmatpush1.msra.mxu0 0.0
    %79 = vmatprep.subr.mxu0 0.0
    %80 = vmatpush1.msra.mxu0 0.0
    %81 = vmatprep.subr.mxu0 0.0
    %82 = vmatpush1.msra.mxu0 0.0
    %83 = vmatprep.subr.mxu0 0.0
    %84 = vmatpush1.msra.mxu0 0.0
    %85 = vmatprep.subr.mxu0 0.0
    %86 = vmatpush1.msra.mxu0 0.0
    %87 = vmatprep.subr.mxu0 0.0
    %88 = vmatpush1.msra.mxu0 0.0
    %89 = vmatprep.subr.mxu0 0.0
    %90 = vmatpush1.msra.mxu0 0.0
    %91 = vmatprep.subr.mxu0 0.0
    %92 = vmatpush1.msra.mxu0 0.0
    %93 = vmatprep.subr.mxu0 0.0
    %94 = vmatpush1.msra.mxu0 0.0
    %95 = vmatprep.subr.mxu0 0.0
    %96 = vmatpush1.msra.mxu0 0.0
    %97 = vmatprep.subr.mxu0 0.0
    %98 = vmatpush1.msra.mxu0 0.0
    %99 = vmatprep.subr.mxu0 0.0
    %100 = vmatpush1.msra.mxu0 0.0
    %101 = vmatprep.subr.mxu0 0.0
    %102 = vmatpush1.msra.mxu0 0.0
    %103 = vmatprep.subr.mxu0 0.0
    %104 = vmatpush1.msra.mxu0 0.0
    %105 = vmatprep.subr.mxu0 0.0
    %106 = vmatpush1.msra.mxu0 0.0
    %107 = vmatprep.subr.mxu0 0.0
    %108 = vmatpush1.msra.mxu0 0.0
    %109 = vmatprep.subr.mxu0 0.0
    %110 = vmatpush1.msra.mxu0 0.0
    %111 = vmatprep.subr.mxu0 0.0
    %112 = vmatpush1.msra.mxu0 0.0
    %113 = vmatprep.subr.mxu0 0.0
    %114 = vmatpush1.msra.mxu0 0.0
    %115 = vmatprep.subr.mxu0 0.0
    %116 = vmatpush1.msra.mxu0 0.0
    %117 = vmatprep.subr.mxu0 0.0
    %118 = vmatpush1.msra.mxu0 0.0
    %119 = vmatprep.subr.mxu0 0.0
    %120 = vmatpush1.msra.mxu0 0.0
    %121 = vmatprep.subr.mxu0 0.0
    %122 = vmatpush1.msra.mxu0 0.0
    %123 = vmatprep.subr.mxu0 0.0
    %124 = vmatpush1.msra.mxu0 0.0
    %125 = vmatprep.subr.mxu0 0.0
    %126 = vmatpush1.msra.mxu0 0.0
    %127 = vmatprep.subr.mxu0 0.0
    %128 = vmatpush1.msra.mxu0 0.0
    %129 = vmatprep.subr.mxu0 0.0
    %130 = vmatpush1.msra.mxu0 0.0
    %131 = vmatprep.subr.mxu0 0.0
    %132 = vmatpush1.msra.mxu0 0.0
    %133 = vmatprep.subr.mxu0 0.0
    %134 = vmatpush1.msra.mxu0 0.0
    %135 = vmatprep.subr.mxu0 0.0
    %136 = vmatpush1.msra.mxu0 0.0
    %137 = vmatprep.mubr.f32.mxu0 0.0
    %138 = vmatmul.mubr.f32.gmra.mrb[0].mxu0 %v68
    %v139 = vpop.f32.mrb[0].mxu0
    %v140 = vadd.f32 %v64, %v139
    %v141 = vpop.f32.mrb[0].mxu0
    %142 = vmatprep.mubr.f32.mxu0 0.0
    %143 = vmatmul.mubr.f32.gmra.mrb[0].mxu0 %v71
    %v144 = vpop.f32.mrb[0].mxu0
    %v145 = vadd.f32 %v64, %v144
    %v146 = vpop.f32.mrb[0].mxu0
    %147 = vdwg.mxu0
    %v148 = vtanh.pop %v140
    %v149 = vtanh.pop %v145
    %v150 = vld [vmem:[%s4] sm:$0x1]
    %v152 = vlaneseq
    %v153 = vshrl.u32 %v152, 7
    %v154 = vsub.s32 0, %v153
    %v155 = vrot.slane %v150, %v154
    %v157 = vmul.f32 %v148, %v155
    %v158 = vmul.f32 %v149, %v155
    %vm159 = vcmask 261120
    %v160 = vsel %vm159, %v157, 0.0
    %161 = vadd.xlane.f32.xlu0 %v160
    %v162 = vpop.xlane.xlu0 %161
    %v163 = vsel %vm159, %v158, 0.0
    %164 = vadd.xlane.f32.xlu0 %v163
    %v165 = vpop.xlane.xlu0 %164
    %s166 = sld [smem:[#allocation2]]
    %v167 = vstv %s166
    %v168 = vadd.f32 %v162, %v167
    %v169 = vadd.f32 %v165, %v167
    %v170 = vsub.f32 %v168, %v168
    %v171 = vsub.f32 %v169, %v169
    %v172 = vmul.f32 %v170, 1.442695
    %v173 = vpow.pop %v172
    %v174 = vmul.f32 %v171, 1.442695
    %v175 = vpow.pop %v174
    %vm176 = vcmask 7168
    %177 = vst.msk [vmem:[%s7] sm:$0xff] %vm176, %v173
    %178 = vst.msk [vmem:[%s7 + $0x8] sm:$0xff] %vm176, %v175
    %v179 = vld [vmem:[%s1] sm:$0x3]
    %v181 = vsel %vm66, %v179, 0
    %183 = vmatprep.subr.mxu0 0.0
    %184 = vmatpush1.msra.mxu0 %v55
    %185 = vmatprep.subr.mxu0 0.0
    %186 = vmatpush1.msra.mxu0 %v56
    %187 = vmatprep.subr.mxu0 0.0
    %188 = vmatpush1.msra.mxu0 0.0
    %189 = vmatprep.subr.mxu0 0.0
    %190 = vmatpush1.msra.mxu0 0.0
    %191 = vmatprep.subr.mxu0 0.0
    %192 = vmatpush1.msra.mxu0 0.0
    %193 = vmatprep.subr.mxu0 0.0
    %194 = vmatpush1.msra.mxu0 0.0
    %195 = vmatprep.subr.mxu0 0.0
    %196 = vmatpush1.msra.mxu0 0.0
    %197 = vmatprep.subr.mxu0 0.0
    %198 = vmatpush1.msra.mxu0 0.0
    %199 = vmatprep.subr.mxu0 0.0
    %200 = vmatpush1.msra.mxu0 0.0
    %201 = vmatprep.subr.mxu0 0.0
    %202 = vmatpush1.msra.mxu0 0.0
    %203 = vmatprep.subr.mxu0 0.0
    %204 = vmatpush1.msra.mxu0 0.0
    %205 = vmatprep.subr.mxu0 0.0
    %206 = vmatpush1.msra.mxu0 0.0
    %207 = vmatprep.subr.mxu0 0.0
    %208 = vmatpush1.msra.mxu0 0.0
    %209 = vmatprep.subr.mxu0 0.0
    %210 = vmatpush1.msra.mxu0 0.0
    %211 = vmatprep.subr.mxu0 0.0
    %212 = vmatpush1.msra.mxu0 0.0
    %213 = vmatprep.subr.mxu0 0.0
    %214 = vmatpush1.msra.mxu0 0.0
    %215 = vmatprep.subr.mxu0 0.0
    %216 = vmatpush1.msra.mxu0 0.0
    %217 = vmatprep.subr.mxu0 0.0
    %218 = vmatpush1.msra.mxu0 0.0
    %219 = vmatprep.subr.mxu0 0.0
    %220 = vmatpush1.msra.mxu0 0.0
    %221 = vmatprep.subr.mxu0 0.0
    %222 = vmatpush1.msra.mxu0 0.0
    %223 = vmatprep.subr.mxu0 0.0
    %224 = vmatpush1.msra.mxu0 0.0
    %225 = vmatprep.subr.mxu0 0.0
    %226 = vmatpush1.msra.mxu0 0.0
    %227 = vmatprep.subr.mxu0 0.0
    %228 = vmatpush1.msra.mxu0 0.0
    %229 = vmatprep.subr.mxu0 0.0
    %230 = vmatpush1.msra.mxu0 0.0
    %231 = vmatprep.subr.mxu0 0.0
    %232 = vmatpush1.msra.mxu0 0.0
    %233 = vmatprep.subr.mxu0 0.0
    %234 = vmatpush1.msra.mxu0 0.0
    %235 = vmatprep.subr.mxu0 0.0
    %236 = vmatpush1.msra.mxu0 0.0
    %237 = vmatprep.subr.mxu0 0.0
    %238 = vmatpush1.msra.mxu0 0.0
    %239 = vmatprep.subr.mxu0 0.0
    %240 = vmatpush1.msra.mxu0 0.0
    %241 = vmatprep.subr.mxu0 0.0
    %242 = vmatpush1.msra.mxu0 0.0
    %243 = vmatprep.subr.mxu0 0.0
    %244 = vmatpush1.msra.mxu0 0.0
    %245 = vmatprep.subr.mxu0 0.0
    %246 = vmatpush1.msra.mxu0 0.0
    %247 = vmatprep.mubr.f32.mxu0 0.0
    %248 = vmatmul.mubr.f32.gmra.mrb[0].mxu0 %v181
    %v249 = vpop.f32.mrb[0].mxu0
    %v250 = vadd.f32 0.0, %v249
    %v251 = vpop.f32.mrb[0].mxu0
    %252 = vdwg.mxu0
    %vm253 = vcmask 123904
    %254 = vst.msk [vmem:[#allocation8] sm:$0x3] %vm253, %v250
    // Predicated region
    $region34: #{tpu_custom_call.1} parent=1 // pred_check
      _
    $region35: #{tpu_custom_call.1} parent=1 // pred_check_branch
      %256 = sbr.rel (0) target = $region37
    $region36: #{tpu_custom_call.1} parent=1 // pred_region
      %s258 = ssub.s32 32, 32
      %259 = vsyncadd [#allocation5], %s258
      %s261 = sshll.u32 [#allocation8], 4
      %s262 = int_to_ptr.vmem [resolvable:$true] %s261
      %264 = dma.vmem_to_hbm [thread:$0]  %s262, 32, %s6, [#allocation5]
    $region37: #{tpu_custom_call.1} parent=1 // pred_fallthru
      _
    // Predicated region
    $region38: #{tpu_custom_call.1} parent=1 // pred_check
      _
    $region39: #{tpu_custom_call.1} parent=1 // pred_check_branch
      %266 = sbr.rel (0) target = $region41
    $region40: #{tpu_custom_call.1} parent=1 // pred_region
      _
    $region41: #{tpu_custom_call.1} parent=1 // pred_fallthru
      _
    // Predicated region
    $region42: #{tpu_custom_call.1} parent=1 // pred_check
      _
    $region43: #{tpu_custom_call.1} parent=1 // pred_check_branch
      %268 = sbr.rel (0) target = $region45
    $region44: #{tpu_custom_call.1} parent=1 // pred_region
      %269 = dma.done [#allocation5], 32
    $region45: #{tpu_custom_call.1} parent=1 // pred_fallthru
      _
    // Predicated region
    $region46: #{tpu_custom_call.1} parent=1 // pred_check
      _
    $region47: #{tpu_custom_call.1} parent=1 // pred_check_branch
      %271 = sbr.rel (0) target = $region49
    $region48: #{tpu_custom_call.1} parent=1 // pred_region
      _
    $region49: #{tpu_custom_call.1} parent=1 // pred_fallthru
      _
    %272 = vsyncpa [#allocation4], 1
    %273 = vsyncpa [#allocation7], 1
    %274 = vsyncpa [#allocation5], 1

</llo_original>
